<compile_context>
chip_gen: v7x
topology: tpu7x:2x2x1
jax: 0.10.0
libtpu: 0.0.40
codegen_flags: <defaults>
</compile_context>

<pallas_src>
import functools

import jax
import jax.numpy as jnp
from jax import lax
from jax.experimental import pallas as pl
from jax.experimental.pallas import tpu as pltpu


def _charbonnier_kernel(pred_ref, tgt_ref, out_ref, *, epsilon, hw, tile_hw,
                        need_mask):
    # pred_ref, tgt_ref: (C, TILE_HW) VMEM blocks (batch dim squeezed).
    # out_ref: (1, 128) VMEM block, resident across the HW grid axis; it holds
    # the running per-batch sum of `err` replicated across all 128 lanes.
    j = pl.program_id(1)

    @pl.when(j == 0)
    def _():
        out_ref[...] = jnp.zeros_like(out_ref)

    p = pred_ref[...].astype(jnp.float32)                   # (C, TILE)
    t = tgt_ref[...].astype(jnp.float32)
    diff = p - t
    mean_c = jnp.mean(diff * diff, axis=0, keepdims=True)   # (1, TILE) sublane reduce
    err = jnp.sqrt(mean_c + epsilon)                        # (1, TILE)

    if need_mask:
        # Zero out lanes of the (padded) tail tile that lie beyond H*W.
        lane = lax.broadcasted_iota(jnp.int32, err.shape, 1) + j * tile_hw
        err = jnp.where(lane < hw, err, 0.0)

    out_ref[...] += jnp.sum(err)   # scalar broadcast into the 128-lane row


def _pick_tile_hw(hw, c, target_bytes_per_buf=2 * 1024 * 1024):
    """Largest 128-multiple tile whose (padded-C x tile x 4B) buffer ~fits target."""
    c_pad = max(8, ((c + 7) // 8) * 8)
    tile = (target_bytes_per_buf // (c_pad * 4)) // 128 * 128
    tile = max(tile, 128)
    if hw <= tile:
        return hw   # full extent along H*W is always a legal block shape
    return tile


def charbonnier_loss(prediction, target, epsilon=1e-6):
    """prediction, target: NCHW arrays (any float dtype). Returns scalar f32 loss."""
    assert prediction.shape == target.shape
    n, c, h, w = prediction.shape
    hw = h * w

    # Free, contiguous reshape NCHW -> (N, C, H*W). No transpose, no up-cast.
    p = prediction.reshape(n, c, hw)
    t = target.reshape(n, c, hw)

    tile_hw = _pick_tile_hw(hw, c)
    num_j = pl.cdiv(hw, tile_hw)
    need_mask = (hw % tile_hw) != 0

    itemsize = jnp.dtype(prediction.dtype).itemsize
    cost = pl.CostEstimate(
        flops=3 * n * c * hw,
        transcendentals=n * hw,
        bytes_accessed=2 * n * c * hw * itemsize,
    )

    partials = pl.pallas_call(
        functools.partial(
            _charbonnier_kernel,
            epsilon=float(epsilon),
            hw=hw,
            tile_hw=tile_hw,
            need_mask=need_mask,
        ),
        out_shape=jax.ShapeDtypeStruct((n, 1, 128), jnp.float32),
        grid=(n, num_j),
        in_specs=[
            pl.BlockSpec((None, c, tile_hw), lambda i, j: (i, 0, j)),
            pl.BlockSpec((None, c, tile_hw), lambda i, j: (i, 0, j)),
        ],
        out_specs=pl.BlockSpec((None, 1, 128), lambda i, j: (i, 0, 0)),
        compiler_params=pltpu.CompilerParams(
            dimension_semantics=("parallel", "arbitrary"),
        ),
        cost_estimate=cost,
    )(p, t)

    # Every lane of partials[i, 0, :] holds batch i's sum of `err` over H*W.
    return jnp.sum(partials[:, 0, 0]) / (n * hw)


def _reference(prediction, target, epsilon=1e-6):
    diff = prediction - target
    diff_sq = diff * diff
    diff_sq_color = jnp.mean(diff_sq, axis=1, keepdims=True)
    error = jnp.sqrt(diff_sq_color + epsilon)
    return jnp.mean(error)


if __name__ == "__main__":
    key = jax.random.PRNGKey(0)
    k_pred, k_tgt = jax.random.split(key)
    # Small NCHW shapes consistent with the module's forward.
    pred = jax.random.normal(k_pred, (2, 4, 16, 16), dtype=jnp.float32)
    tgt = jax.random.normal(k_tgt, (2, 4, 16, 16), dtype=jnp.float32)

    loss = jax.block_until_ready(charbonnier_loss(pred, tgt))
    ref = jax.block_until_ready(_reference(pred, tgt))

    assert jnp.allclose(loss, ref, rtol=1e-5, atol=1e-6), (loss, ref)
    print("KERNEL_OK")
</pallas_src>

<mosaic_0001>
module attributes {stable_mosaic.version = 11 : i64} {
  func.func @_charbonnier_kernel(%arg0: i32, %arg1: i32, %arg2: memref<1x4x256xf32, #tpu.memory_space<vmem>>, %arg3: memref<1x4x256xf32, #tpu.memory_space<vmem>>, %arg4: memref<1x1x128xf32, #tpu.memory_space<vmem>>) attributes {dimension_semantics = [#tpu.dimension_semantics<parallel>, #tpu.dimension_semantics<arbitrary>], iteration_bounds = array<i64: 2, 1>, scalar_prefetch = 0 : i64, scratch_operands = 0 : i64, tpu.core_type = #tpu.core_type<tc>, window_params = [{transform_indices = @transform_0, window_bounds = array<i64: 1, 4, 256>}, {transform_indices = @transform_1, window_bounds = array<i64: 1, 4, 256>}, {transform_indices = @transform_2, window_bounds = array<i64: 1, 1, 128>}]} {
    %c0_i32 = arith.constant 0 : i32
    %0 = arith.cmpi eq, %arg1, %c0_i32 : i32
    %1 = arith.extui %0 : i1 to i32
    %c0_i32_0 = arith.constant 0 : i32
    %2 = arith.cmpi ne, %1, %c0_i32_0 : i32
    scf.if %2 {
      %cst_15 = arith.constant 0.000000e+00 : f32
      %27 = vector.broadcast %cst_15 : f32 to vector<1x128xf32>
      %c0_16 = arith.constant 0 : index
      %c0_17 = arith.constant 0 : index
      %c0_18 = arith.constant 0 : index
      %28 = vector.load %arg4[%c0_16, %c0_17, %c0_18] : memref<1x1x128xf32, #tpu.memory_space<vmem>>, vector<1x1x128xf32>
      %29 = vector.shape_cast %28 : vector<1x1x128xf32> to vector<1x128xf32>
      %30 = vector.shape_cast %27 : vector<1x128xf32> to vector<1x1x128xf32>
      tpu.vector_store %arg4[%c0_16, %c0_17, %c0_18], %30 {strides = array<i32>} : memref<1x1x128xf32, #tpu.memory_space<vmem>>, vector<1x1x128xf32>,
    } else {
    }
    %c0 = arith.constant 0 : index
    %c0_1 = arith.constant 0 : index
    %c0_2 = arith.constant 0 : index
    %3 = vector.load %arg2[%c0, %c0_1, %c0_2] : memref<1x4x256xf32, #tpu.memory_space<vmem>>, vector<1x4x256xf32>
    %4 = vector.shape_cast %3 : vector<1x4x256xf32> to vector<4x256xf32>
    %c0_3 = arith.constant 0 : index
    %c0_4 = arith.constant 0 : index
    %c0_5 = arith.constant 0 : index
    %5 = vector.load %arg3[%c0_3, %c0_4, %c0_5] : memref<1x4x256xf32, #tpu.memory_space<vmem>>, vector<1x4x256xf32>
    %6 = vector.shape_cast %5 : vector<1x4x256xf32> to vector<4x256xf32>
    %7 = arith.subf %4, %6 : vector<4x256xf32>
    %8 = arith.mulf %7, %7 : vector<4x256xf32>
    %cst = arith.constant dense<0.000000e+00> : vector<256xf32>
    %9 = vector.multi_reduction <add>, %8, %cst [0] : vector<4x256xf32> to vector<256xf32>
    %10 = vector.shape_cast %9 : vector<256xf32> to vector<1x256xf32>
    %cst_6 = arith.constant 4.000000e+00 : f32
    %11 = vector.broadcast %cst_6 : f32 to vector<1x256xf32>
    %12 = arith.divf %10, %11 : vector<1x256xf32>
    %cst_7 = arith.constant 9.99999997E-7 : f32
    %13 = vector.broadcast %cst_7 : f32 to vector<1x256xf32>
    %14 = arith.addf %12, %13 : vector<1x256xf32>
    %15 = math.sqrt %14 : vector<1x256xf32>
    %c0_8 = arith.constant 0 : index
    %c0_9 = arith.constant 0 : index
    %c0_10 = arith.constant 0 : index
    %16 = vector.load %arg4[%c0_8, %c0_9, %c0_10] : memref<1x1x128xf32, #tpu.memory_space<vmem>>, vector<1x1x128xf32>
    %17 = vector.shape_cast %16 : vector<1x1x128xf32> to vector<1x128xf32>
    %18 = vector.shape_cast %15 : vector<1x256xf32> to vector<1x1x256xf32>
    %cst_11 = arith.constant dense<0.000000e+00> : vector<1xf32>
    %19 = vector.multi_reduction <add>, %18, %cst_11 [1, 2] : vector<1x1x256xf32> to vector<1xf32>
    %20 = vector.shape_cast %19 : vector<1xf32> to vector<1x1x1xf32>
    %21 = vector.extract %20[0, 0, 0] : f32 from vector<1x1x1xf32>
    %22 = vector.broadcast %21 : f32 to vector<1x128xf32>
    %23 = arith.addf %17, %22 : vector<1x128xf32>
    %c0_12 = arith.constant 0 : index
    %c0_13 = arith.constant 0 : index
    %c0_14 = arith.constant 0 : index
    %24 = vector.load %arg4[%c0_12, %c0_13, %c0_14] : memref<1x1x128xf32, #tpu.memory_space<vmem>>, vector<1x1x128xf32>
    %25 = vector.shape_cast %24 : vector<1x1x128xf32> to vector<1x128xf32>
    %26 = vector.shape_cast %23 : vector<1x128xf32> to vector<1x1x128xf32>
    tpu.vector_store %arg4[%c0_12, %c0_13, %c0_14], %26 {strides = array<i32>} : memref<1x1x128xf32, #tpu.memory_space<vmem>>, vector<1x1x128xf32>,
    return
  }
  func.func @transform_0(%arg0: i32, %arg1: i32) -> (i32, i32, i32) {
    %c0_i32 = arith.constant 0 : i32
    %c0_i32_0 = arith.constant 0 : i32
    return %arg0, %c0_i32, %arg1 : i32, i32, i32
  }
  func.func @transform_1(%arg0: i32, %arg1: i32) -> (i32, i32, i32) {
    %c0_i32 = arith.constant 0 : i32
    %c0_i32_0 = arith.constant 0 : i32
    return %arg0, %c0_i32, %arg1 : i32, i32, i32
  }
  func.func @transform_2(%arg0: i32, %arg1: i32) -> (i32, i32, i32) {
    %c0_i32 = arith.constant 0 : i32
    %c0_i32_0 = arith.constant 0 : i32
    %c0_i32_1 = arith.constant 0 : i32
    return %arg0, %c0_i32, %c0_i32_0 : i32, i32, i32
  }
}

</mosaic_0001>

<llo_original>
// kernel: tpu_custom_call.1
$region0: #{tpu_custom_call.1}
  #allocation0 [shape = 'u32[]', space=smem, size = 0x4, offset = 0x4, fixed_abs, tag = 'smem constant byte address 0x4 - core index']
  #allocation1 [shape = 'u32[144,128]{1,0:T(1,128)}', space=vmem, size = 0x12000, scoped, tag = 'internal scratch']
  %s0 = inlined_call_operand.hbm [shape: f32[2,4,256], index: 0, kind: input, shape index: {}]
  %s1 = inlined_call_operand.hbm [shape: f32[2,4,256], index: 1, kind: input, shape index: {}]
  %s2 = inlined_call_operand.hbm [shape: f32[2,1,128], index: 2, kind: output, shape index: {}]
  %s3 = sld [smem:[#allocation0]]
  $region53: #{tpu_custom_call.1} parent=0
    _
  %s5 = ssub.s32 1, %s3
  %s6 = scalar_select 0, %s5, %s3
  $region1: #{tpu_custom_call.1} parent=0
    #allocation2 [shape = 'u8[8192]{0}', space=vmem, size = 0x2000, scoped, tag = 'input window, operand 0']
    #allocation3 [shape = 's32[2]{0}', space=sflag, size = 0x8, scoped, tag = 'scoped memory for tpu_custom_call.1']
    #allocation4 [shape = 's32[2]{0}', space=sflag, size = 0x8, scoped, tag = 'scoped memory for tpu_custom_call.1']
    #allocation5 [shape = 'u8[8192]{0}', space=vmem, size = 0x2000, scoped, tag = 'input window, operand 1']
    #allocation6 [shape = 's32[2]{0}', space=sflag, size = 0x8, scoped, tag = 'scoped memory for tpu_custom_call.1']
    #allocation7 [shape = 'u8[1024]{0}', space=vmem, size = 0x400, scoped, tag = 'output window, operand 0']
    %7 = vsyncpa [#allocation3], 0
    %s8 = scalar_lea.sflag [#allocation3], 1
    %9 = vsyncpa %s8, 0
    %10 = vsyncpa [#allocation6], 0
    %s11 = scalar_lea.sflag [#allocation6], 1
    %12 = vsyncpa %s11, 0
    %13 = vsyncpa [#allocation4], 0
    %s14 = scalar_lea.sflag [#allocation4], 1
    %15 = vsyncpa %s14, 0
    loop: start=0, step=1, limit=4
    $region2: #{tpu_custom_call.1} parent=1 // loop_pre_header
      _
    $region3: #{tpu_custom_call.1} parent=1 // loop_header
      %s17 = sphi 0, %s21
      %p18 = scmp.ge.s32.totalorder %s17, 4
      %s24 = sphi 0, %s36
      %s25 = sphi 0, %s32
      %s26 = sphi 0, %s24
      %s27 = sphi 0, %s25
      %s28 = sphi 0, %s26
      %s29 = sphi 0, %s27
      %s41 = sphi 0, %s43
      %s44 = sphi 0, %s41
      %s45 = sphi 0, %s44
      %s61 = sphi 0, %s45
      %s69 = sphi 0, %s71
      %s72 = sphi 0, %s69
      %s73 = sphi 0, %s72
      %s89 = sphi 0, %s73
      %s95 = sphi 0, %s97
      %s98 = sphi 0, %s95
      %s99 = sphi 0, %s98
      %s115 = sphi 0, %s99
    $region4: #{tpu_custom_call.1} parent=1 // loop_header_branch
      %20 = sbr.rel (%p18) target = $region8
    $region5: #{tpu_custom_call.1} parent=1 // loop_body
      %s22 = ssub.s32 %s17, 1
      %s23 = ssub.s32 %s17, 2
      %s30 = sadd.s32 1, %s25
      %p31 = scmp.ge.s32.totalorder %s30, 1
      %s32 = scalar_select %p31, 0, %s30
      %s33 = sadd.s32 1, %s24
      %s34 = scalar_select %p31, %s33, %s24
      %p35 = scmp.ge.s32.totalorder %s34, 2
      %s36 = scalar_select %p35, 0, %s34
      %s37 = ssub.s32 %s24, %s36
      %s38 = ssub.s32 %s25, %s32
      %s39 = sor.u32 %s37, %s38
      %p40 = scmp.eq.s32.totalorder %s39, 0
      %s42 = sadd.s32 %s41, 1
      %s43 = scalar_select %p40, %s41, %s42
      %p46 = pneg %p40
      %p47 = scmp.eq.s32.totalorder %s17, 1
      %p48 = por %p46, %p47
      %p49 = scmp.ne.s32.totalorder %s41, %s44
      %p50 = scmp.eq.s32.totalorder %s17, 0
      %p51 = por %p49, %p50
      %p52 = scmp.ne.s32.totalorder %s41, %s44
      %p53 = scmp.eq.s32.totalorder %s22, 1
      %p54 = por %p52, %p53
      %p55 = scmp.ne.s32.totalorder %s44, %s45
      %p56 = scmp.eq.s32.totalorder %s22, 0
      %p57 = por %p55, %p56
      %p58 = scmp.ne.s32.totalorder %s44, %s45
      %p59 = scmp.eq.s32.totalorder %s23, 1
      %p60 = por %p58, %p59
      %p62 = scmp.ne.s32.totalorder %s45, %s61
      %p63 = scmp.eq.s32.totalorder %s23, 0
      %p64 = por %p62, %p63
      %s65 = ssub.s32 %s24, %s36
      %s66 = ssub.s32 %s25, %s32
      %s67 = sor.u32 %s65, %s66
      %p68 = scmp.eq.s32.totalorder %s67, 0
      %s70 = sadd.s32 %s69, 1
      %s71 = scalar_select %p68, %s69, %s70
      %p74 = pneg %p68
      %p75 = scmp.eq.s32.totalorder %s17, 1
      %p76 = por %p74, %p75
      %p77 = scmp.ne.s32.totalorder %s69, %s72
      %p78 = scmp.eq.s32.totalorder %s17, 0
      %p79 = por %p77, %p78
      %p80 = scmp.ne.s32.totalorder %s69, %s72
      %p81 = scmp.eq.s32.totalorder %s22, 1
      %p82 = por %p80, %p81
      %p83 = scmp.ne.s32.totalorder %s72, %s73
      %p84 = scmp.eq.s32.totalorder %s22, 0
      %p85 = por %p83, %p84
      %p86 = scmp.ne.s32.totalorder %s72, %s73
      %p87 = scmp.eq.s32.totalorder %s23, 1
      %p88 = por %p86, %p87
      %p90 = scmp.ne.s32.totalorder %s73, %s89
      %p91 = scmp.eq.s32.totalorder %s23, 0
      %p92 = por %p90, %p91
      %s93 = ssub.s32 %s24, %s36
      %p94 = scmp.eq.s32.totalorder %s93, 0
      %s96 = sadd.s32 %s95, 1
      %s97 = scalar_select %p94, %s95, %s96
      %p100 = pneg %p94
      %p101 = scmp.eq.s32.totalorder %s17, 1
      %p102 = por %p100, %p101
      %p103 = scmp.ne.s32.totalorder %s95, %s98
      %p104 = scmp.eq.s32.totalorder %s17, 0
      %p105 = por %p103, %p104
      %p106 = scmp.ne.s32.totalorder %s95, %s98
      %p107 = scmp.eq.s32.totalorder %s22, 1
      %p108 = por %p106, %p107
      %p109 = scmp.ne.s32.totalorder %s98, %s99
      %p110 = scmp.eq.s32.totalorder %s22, 0
      %p111 = por %p109, %p110
      %p112 = scmp.ne.s32.totalorder %s98, %s99
      %p113 = scmp.eq.s32.totalorder %s23, 1
      %p114 = por %p112, %p113
      %p116 = scmp.ne.s32.totalorder %s99, %s115
      %p117 = scmp.eq.s32.totalorder %s23, 0
      %p118 = por %p116, %p117
      %p119 = scmp.le.s32.totalorder 1, %s17
      %p120 = scmp.lt.s32.totalorder %s17, 3
      %p121 = pnand %p119, %p120
      %p122 = pneg %p121
      // Predicated region
      $region9: #{tpu_custom_call.1} parent=5 // pred_check
        _
      $region10: #{tpu_custom_call.1} parent=5 // pred_check_branch
        %124 = sbr.rel (%p121) target = $region12
      $region11: #{tpu_custom_call.1} parent=5 // pred_region
        %s125 = ssub.s32 %s17, 1
      $region12: #{tpu_custom_call.1} parent=5 // pred_fallthru
        _
      %p126 = scmp.lt.s32.totalorder %s17, 2
      // Predicated region
      $region13: #{tpu_custom_call.1} parent=5 // pred_check
        %p127 = pneg %p126
      $region14: #{tpu_custom_call.1} parent=5 // pred_check_branch
        %129 = sbr.rel (%p127) target = $region16
      $region15: #{tpu_custom_call.1} parent=5 // pred_region
        // Predicated region
        $region17: #{tpu_custom_call.1} parent=15 // pred_check
          %p130 = pneg %p51
        $region18: #{tpu_custom_call.1} parent=15 // pred_check_branch
          %132 = sbr.rel (%p130) target = $region20
        $region19: #{tpu_custom_call.1} parent=15 // pred_region
          %s133 = sand.u32 %s41, 1
          %s134 = scalar_lea.sflag [#allocation3], %s133
          %s135 = sand.u32 %s41, 1
          %s136 = smul.addr %s135, 8
          %s137 = scalar_lea.vmem [#allocation2], %s136
          %s138 = smul.u32 2, %s25
          %s140 = ssub.s32 128, 128
          %141 = vsyncadd %s134, %s140
          %s142 = smul.addr %s24, 2
          %s143 = sadd.s32 %s138, %s142
          %s144 = smul.addr %s143, 64
          %s145 = scalar_lea.hbm %s0, %s144
          %s147 = sshll.u32 %s137, 4
          %s148 = int_to_ptr.vmem [resolvable:$true] %s147
          %150 = dma.hbm_to_vmem [thread:$0]  %s145, 128, %s148, %s134
        $region20: #{tpu_custom_call.1} parent=15 // pred_fallthru
          _
        // Predicated region
        $region21: #{tpu_custom_call.1} parent=15 // pred_check
          %p151 = pneg %p79
        $region22: #{tpu_custom_call.1} parent=15 // pred_check_branch
          %153 = sbr.rel (%p151) target = $region24
        $region23: #{tpu_custom_call.1} parent=15 // pred_region
          %s154 = sand.u32 %s69, 1
          %s155 = scalar_lea.sflag [#allocation6], %s154
          %s156 = sand.u32 %s69, 1
          %s157 = smul.addr %s156, 8
          %s158 = scalar_lea.vmem [#allocation5], %s157
          %s159 = smul.u32 2, %s25
          %s161 = ssub.s32 128, 128
          %162 = vsyncadd %s155, %s161
          %s163 = smul.addr %s24, 2
          %s164 = sadd.s32 %s159, %s163
          %s165 = smul.addr %s164, 64
          %s166 = scalar_lea.hbm %s1, %s165
          %s168 = sshll.u32 %s158, 4
          %s169 = int_to_ptr.vmem [resolvable:$true] %s168
          %171 = dma.hbm_to_vmem [thread:$0]  %s166, 128, %s169, %s155
        $region24: #{tpu_custom_call.1} parent=15 // pred_fallthru
          _
      $region16: #{tpu_custom_call.1} parent=5 // pred_fallthru
        _
      %p172 = scmp.le.s32.totalorder 1, %s17
      %p173 = scmp.lt.s32.totalorder %s17, 3
      %p174 = pnand %p172, %p173
      %p175 = pneg %p174
      // Predicated region
      $region25: #{tpu_custom_call.1} parent=5 // pred_check
        _
      $region26: #{tpu_custom_call.1} parent=5 // pred_check_branch
        %177 = sbr.rel (%p174) target = $region28
      $region27: #{tpu_custom_call.1} parent=5 // pred_region
        %s178 = ssub.s32 %s17, 1
        %s179 = sand.u32 %s44, 1
        %s180 = scalar_lea.sflag [#allocation3], %s179
        %s181 = sand.u32 %s44, 1
        %s182 = smul.addr %s181, 8
        %s183 = scalar_lea.vmem [#allocation2], %s182
        // Predicated region
        $region29: #{tpu_custom_call.1} parent=27 // pred_check
          %p184 = pneg %p57
        $region30: #{tpu_custom_call.1} parent=27 // pred_check_branch
          %186 = sbr.rel (%p184) target = $region32
        $region31: #{tpu_custom_call.1} parent=27 // pred_region
          %187 = dma.done %s180, 128
        $region32: #{tpu_custom_call.1} parent=27 // pred_fallthru
          _
        %s188 = sand.u32 %s72, 1
        %s189 = scalar_lea.sflag [#allocation6], %s188
        %s190 = sand.u32 %s72, 1
        %s191 = smul.addr %s190, 8
        %s192 = scalar_lea.vmem [#allocation5], %s191
        // Predicated region
        $region33: #{tpu_custom_call.1} parent=27 // pred_check
          %p193 = pneg %p85
        $region34: #{tpu_custom_call.1} parent=27 // pred_check_branch
          %195 = sbr.rel (%p193) target = $region36
        $region35: #{tpu_custom_call.1} parent=27 // pred_region
          %196 = dma.done %s189, 128
        $region36: #{tpu_custom_call.1} parent=27 // pred_fallthru
          _
        %s197 = sand.u32 %s44, 1
        %s198 = scalar_lea.sflag [#allocation3], %s197
        %s199 = sand.u32 %s44, 1
        %s200 = smul.addr %s199, 8
        %s201 = scalar_lea.vmem [#allocation2], %s200
        %p202 = pneg %p57
        %p203 = pneg %p54
        %s204 = sand.u32 %s72, 1
        %s205 = scalar_lea.sflag [#allocation6], %s204
        %s206 = sand.u32 %s72, 1
        %s207 = smul.addr %s206, 8
        %s208 = scalar_lea.vmem [#allocation5], %s207
        %p209 = pneg %p85
        %p210 = pneg %p82
        %p211 = pneg %p111
        %p212 = pneg %p108
        %s213 = sand.u32 %s98, 1
        %s214 = scalar_lea.sflag [#allocation4], %s213
        %s215 = sand.u32 %s98, 1
        %s216 = scalar_lea.vmem [#allocation7], %s215
        %s217 = smul.u32 2, %s27
        %s218 = smul.u32 2, %s27
        %p219 = scmp.eq.s32.totalorder %s27, 0
        // Predicated region
        $region37: #{tpu_custom_call.1} parent=27 // pred_check
          %p220 = pneg %p219
        $region38: #{tpu_custom_call.1} parent=27 // pred_check_branch
          %222 = sbr.rel (%p220) target = $region40
        $region39: #{tpu_custom_call.1} parent=27 // pred_region
          %223 = vst [vmem:[%s216] sm:$0x1] 0.0
        $region40: #{tpu_custom_call.1} parent=27 // pred_fallthru
          _
        %v224 = vld [vmem:[%s183] sm:$0xff]
        %v225 = vld [vmem:[%s192] sm:$0xff]
        %v226 = vsub.f32 %v224, %v225
        %v227 = vmul.f32 %v226, %v226
        %v229 = vcombine.high %v227, %v227
        %vm231 = vcmask 1043456
        %v232 = vsel %vm231, %v227, 0.0
        %v233 = vrot.slane %v232, 4
        %v234 = vadd.f32 %v232, %v233
        %v235 = vrot.slane %v234, 2
        %v236 = vadd.f32 %v234, %v235
        %v237 = vrot.slane %v236, 1
        %v238 = vadd.f32 %v236, %v237
        %v239 = vsel %vm231, %v229, 0.0
        %v240 = vrot.slane %v239, 4
        %v241 = vadd.f32 %v239, %v240
        %v242 = vrot.slane %v241, 2
        %v243 = vadd.f32 %v241, %v242
        %v244 = vrot.slane %v243, 1
        %v245 = vadd.f32 %v243, %v244
        %v246 = vrcp.pop 4.0
        %v247 = vmul.f32 %v238, %v246
        %v248 = vmul.f32 %v245, %v246
        %v249 = vadd.f32 %v247, 1e-06
        %v250 = vadd.f32 %v248, 1e-06
        %v251 = vrsqrt.pop %v249
        %v252 = vmul.f32 %v249, %v251
        %vm253 = vcmp.eq.f32.partialorder %v249, inf
        %v254 = vsel %vm253, %v249, %v252
        %vm255 = vcmp.eq.f32.partialorder %v249, 0.0
        %v256 = vand.u32 %v249, 2147483648
        %v257 = vsel %vm255, %v256, %v254
        %v258 = vrsqrt.pop %v250
        %v259 = vmul.f32 %v250, %v258
        %vm260 = vcmp.eq.f32.partialorder %v250, inf
        %v261 = vsel %vm260, %v250, %v259
        %vm262 = vcmp.eq.f32.partialorder %v250, 0.0
        %v263 = vand.u32 %v250, 2147483648
        %v264 = vsel %vm262, %v263, %v261
        %v265 = vld [vmem:[%s216] sm:$0x1]
        %vm266 = vcmask 1040384
        %v267 = vsel %vm266, %v257, 0.0
        %v268 = vsel %vm266, %v264, 0.0
        %v269 = vadd.f32 %v267, %v268
        %270 = vadd.xlane.f32.xlu0 %v269
        %v271 = vpop.xlane.xlu0 %270
        %v272 = vrot.slane %v271, 4
        %v273 = vadd.f32 %v271, %v272
        %v274 = vrot.slane %v273, 2
        %v275 = vadd.f32 %v273, %v274
        %v276 = vrot.slane %v275, 1
        %v277 = vadd.f32 %v275, %v276
        %s278 = vtos %v277
        %v279 = vstv %s278
        %v280 = vadd.f32 %v265, %v279
        %281 = vst [vmem:[%s216] sm:$0x1] %v280
        %s282 = sand.u32 %s98, 1
        %s283 = scalar_lea.sflag [#allocation4], %s282
        %s284 = sand.u32 %s98, 1
        %s285 = scalar_lea.vmem [#allocation7], %s284
        // Predicated region
        $region41: #{tpu_custom_call.1} parent=27 // pred_check
          %p286 = pneg %p108
        $region42: #{tpu_custom_call.1} parent=27 // pred_check_branch
          %288 = sbr.rel (%p286) target = $region44
        $region43: #{tpu_custom_call.1} parent=27 // pred_region
          %s290 = ssub.s32 16, 16
          %291 = vsyncadd %s283, %s290
          %s292 = smul.addr %s26, 16
          %s293 = scalar_lea.hbm %s2, %s292
          %s295 = sshll.u32 %s285, 4
          %s296 = int_to_ptr.vmem [resolvable:$true] %s295
          %298 = dma.vmem_to_hbm [thread:$0]  %s296, 16, %s293, %s283
        $region44: #{tpu_custom_call.1} parent=27 // pred_fallthru
          _
      $region28: #{tpu_custom_call.1} parent=5 // pred_fallthru
        _
      %p299 = scmp.le.s32.totalorder 2, %s17
      // Predicated region
      $region45: #{tpu_custom_call.1} parent=5 // pred_check
        %p300 = pneg %p299
      $region46: #{tpu_custom_call.1} parent=5 // pred_check_branch
        %302 = sbr.rel (%p300) target = $region48
      $region47: #{tpu_custom_call.1} parent=5 // pred_region
        %s303 = ssub.s32 %s17, 2
        // Predicated region
        $region49: #{tpu_custom_call.1} parent=47 // pred_check
          %p304 = pneg %p114
        $region50: #{tpu_custom_call.1} parent=47 // pred_check_branch
          %306 = sbr.rel (%p304) target = $region52
        $region51: #{tpu_custom_call.1} parent=47 // pred_region
          %s307 = sand.u32 %s99, 1
          %s308 = scalar_lea.sflag [#allocation4], %s307
          %s309 = sand.u32 %s99, 1
          %s310 = scalar_lea.vmem [#allocation7], %s309
          %311 = dma.done %s308, 16
        $region52: #{tpu_custom_call.1} parent=47 // pred_fallthru
          _
      $region48: #{tpu_custom_call.1} parent=5 // pred_fallthru
        _
    $region6: #{tpu_custom_call.1} parent=1 // loop_footer
      %s21 = sadd.s32 1, %s17
    $region7: #{tpu_custom_call.1} parent=1 // loop_footer_branch
      %16 = sbr.rel target = $region3
    $region8: #{tpu_custom_call.1} parent=1 // loop_exit
      _
    %312 = vsyncpa [#allocation3], 1
    %s313 = scalar_lea.sflag [#allocation3], 1
    %314 = vsyncpa %s313, 1
    %315 = vsyncpa [#allocation6], 1
    %s316 = scalar_lea.sflag [#allocation6], 1
    %317 = vsyncpa %s316, 1
    %318 = vsyncpa [#allocation4], 1
    %s319 = scalar_lea.sflag [#allocation4], 1
    %320 = vsyncpa %s319, 1

</llo_original>
